<compile_context>
chip_gen: v5e
topology: v5e:2x2
jax: 0.10.0
libtpu: 0.0.40
codegen_flags: <defaults>
</compile_context>

<pallas_src>
import jax
import jax.numpy as jnp
from jax.experimental import pallas as pl
from jax.experimental.pallas import tpu as pltpu


_LANE_CAP = 32768              # max lane-tile width (multiple of 128) ~ 1 MiB slab
_TARGET_BLOCK_BYTES = 2 << 20  # ~2 MiB output blocks (1-4 MiB sweet spot, v7x-biased)


def _fill_kernel(t_ref, o_ref):
    """t_ref: (..., 1) f32 per-row time values; o_ref: output tile.

    Writes 3*t^2 broadcast along the last (lane) axis of the output tile.
    """
    tb = t_ref[...].astype(jnp.float32)
    val = ((3.0 * tb) * tb).astype(o_ref.dtype)
    o_ref[...] = jnp.broadcast_to(val, o_ref.shape)


def dummy_model_forward(x, t, *, xla_fallback_below_bytes=0):
    """out = (x*0+1) * 3 * t**2  ==  3*t[b]^2 broadcast to x.shape."""
    B = int(x.shape[0])
    F = 1
    for d in x.shape[1:]:
        F *= int(d)

    out_dtype = jnp.promote_types(x.dtype, t.dtype)
    itemsize = jnp.dtype(out_dtype).itemsize
    t32 = t.reshape(B).astype(jnp.float32)

    if F == 0 or B == 0:
        return jnp.zeros(x.shape, out_dtype)

    total_bytes = B * F * itemsize

    # Optional pure-XLA path for tiny outputs (disabled by default so the
    # Pallas kernel is always exercised in tests).
    if total_bytes < xla_fallback_below_bytes:
        val = (3.0 * t32 * t32).astype(out_dtype)
        return jnp.broadcast_to(val.reshape((B,) + (1,) * (x.ndim - 1)), x.shape)

    cost = pl.CostEstimate(flops=0, transcendentals=0,
                           bytes_accessed=total_bytes + B * 4)

    # Sublane rows per batch so each block is made of full native vreg tiles
    # (8 for 32-bit, 16 for 16-bit, 32 for 8-bit dtypes).
    r_pref = 8 * max(1, 4 // itemsize)
    if F % r_pref == 0:
        R = r_pref
    elif F % 8 == 0:
        R = 8
    else:
        R = 0  # feature count not sublane-divisible -> exact 2-D path below

    if R:
        # ---- sublane/lane-dense 3-D path: output (B, R, F//R), no padding ----
        Cc = F // R
        # Full extent if it fits one tile (no masking), else 128-multiple tiles
        # with a partial (masked) trailing block.
        tile_c = Cc if Cc <= _LANE_CAP else _LANE_CAP
        n_lane = pl.cdiv(Cc, tile_c)
        per_batch_bytes = R * tile_c * itemsize
        # Batch folding: pack several batch rows per block when F is small.
        Bt = max(1, min(B, _TARGET_BLOCK_BYTES // per_batch_bytes))
        if n_lane == 1 and B > 1:
            # Keep >= 2 grid steps so v7x's two TensorCores both get work.
            Bt = min(Bt, max(1, B // 2))
        grid = (pl.cdiv(B, Bt), n_lane)

        t3 = jnp.broadcast_to(t32.reshape(B, 1, 1), (B, R, 1))
        out3 = pl.pallas_call(
            _fill_kernel,
            out_shape=jax.ShapeDtypeStruct((B, R, Cc), out_dtype),
            grid=grid,
            in_specs=[pl.BlockSpec((Bt, R, 1), lambda i, j: (i, 0, 0))],
            out_specs=pl.BlockSpec((Bt, R, tile_c), lambda i, j: (i, 0, j)),
            compiler_params=pltpu.CompilerParams(
                dimension_semantics=("parallel", "parallel")),
            cost_estimate=cost,
        )(t3)
        return out3.reshape(x.shape)

    # ---- fallback: exact (B, F) 2-D output, lane-tiled, full-batch block ----
    rows = max(8, -(-B // 8) * 8)  # sublane-padded rows, for VMEM sizing only
    lane_budget = max(128, (_TARGET_BLOCK_BYTES // (rows * itemsize)) // 128 * 128)
    tile_c = F if F <= lane_budget else lane_budget
    grid = (pl.cdiv(F, tile_c),)

    t2 = t32.reshape(B, 1)
    out2 = pl.pallas_call(
        _fill_kernel,
        out_shape=jax.ShapeDtypeStruct((B, F), out_dtype),
        grid=grid,
        in_specs=[pl.BlockSpec((B, 1), lambda j: (0, 0))],
        out_specs=pl.BlockSpec((B, tile_c), lambda j: (0, j)),
        compiler_params=pltpu.CompilerParams(dimension_semantics=("parallel",)),
        cost_estimate=cost,
    )(t2)
    return out2.reshape(x.shape)


if __name__ == "__main__":
    key = jax.random.PRNGKey(0)
    kx, kt = jax.random.split(key)

    B, C, H, W = 2, 4, 16, 16
    x = jax.random.normal(kx, (B, C, H, W), dtype=jnp.float32)
    t = jax.random.uniform(kt, (B,), dtype=jnp.float32)

    out = dummy_model_forward(x, t)
    out = jax.block_until_ready(out)

    # Reference (pure JAX): (x*0+1) * 3 * t^2 broadcast per batch row.
    ref = (x * 0.0 + 1.0) * 3.0 * (t.reshape(B, 1, 1, 1) ** 2)
    assert out.shape == (B, C, H, W)
    assert out.dtype == ref.dtype
    assert jnp.allclose(out, ref, atol=1e-6, rtol=1e-6), "mismatch vs reference"

    print("KERNEL_OK")
</pallas_src>

<mosaic_0001>
module attributes {stable_mosaic.version = 11 : i64} {
  func.func @_fill_kernel(%arg0: i32, %arg1: i32, %arg2: memref<1x8x1xf32, #tpu.memory_space<vmem>>, %arg3: memref<1x8x128xf32, #tpu.memory_space<vmem>>) attributes {dimension_semantics = [#tpu.dimension_semantics<parallel>, #tpu.dimension_semantics<parallel>], iteration_bounds = array<i64: 2, 1>, scalar_prefetch = 0 : i64, scratch_operands = 0 : i64, tpu.core_type = #tpu.core_type<tc>, window_params = [{transform_indices = @transform_0, window_bounds = array<i64: 1, 8, 1>}, {transform_indices = @transform_1, window_bounds = array<i64: 1, 8, 128>}]} {
    %c0 = arith.constant 0 : index
    %c0_0 = arith.constant 0 : index
    %c0_1 = arith.constant 0 : index
    %0 = vector.load %arg2[%c0, %c0_0, %c0_1] : memref<1x8x1xf32, #tpu.memory_space<vmem>>, vector<1x8x1xf32>
    %cst = arith.constant 3.000000e+00 : f32
    %1 = vector.broadcast %cst : f32 to vector<1x8x1xf32>
    %2 = arith.mulf %1, %0 : vector<1x8x1xf32>
    %3 = arith.mulf %2, %0 : vector<1x8x1xf32>
    %4 = vector.shape_cast %3 : vector<1x8x1xf32> to vector<1x8x1xf32>
    %5 = vector.broadcast %4 : vector<1x8x1xf32> to vector<1x8x128xf32>
    %c0_2 = arith.constant 0 : index
    %c0_3 = arith.constant 0 : index
    %c0_4 = arith.constant 0 : index
    %6 = vector.load %arg3[%c0_2, %c0_3, %c0_4] : memref<1x8x128xf32, #tpu.memory_space<vmem>>, vector<1x8x128xf32>
    tpu.vector_store %arg3[%c0_2, %c0_3, %c0_4], %5 {strides = array<i32>} : memref<1x8x128xf32, #tpu.memory_space<vmem>>, vector<1x8x128xf32>,
    return
  }
  func.func @transform_0(%arg0: i32, %arg1: i32) -> (i32, i32, i32) {
    %c0_i32 = arith.constant 0 : i32
    %c0_i32_0 = arith.constant 0 : i32
    %c0_i32_1 = arith.constant 0 : i32
    return %arg0, %c0_i32, %c0_i32_0 : i32, i32, i32
  }
  func.func @transform_1(%arg0: i32, %arg1: i32) -> (i32, i32, i32) {
    %c0_i32 = arith.constant 0 : i32
    %c0_i32_0 = arith.constant 0 : i32
    return %arg0, %c0_i32, %arg1 : i32, i32, i32
  }
}

</mosaic_0001>

<llo_original>
// kernel: tpu_custom_call.1
$region0: #{tpu_custom_call.1}
  #allocation0 [shape = 'u32[]', space=smem, size = 0x4, offset = 0x4, fixed_abs, tag = 'smem constant byte address 0x4 - core index']
  #allocation1 [shape = 'u32[72,128]{1,0:T(1,128)}', space=vmem, size = 0x9000, scoped, tag = 'internal scratch']
  %s0 = inlined_call_operand.vmem [shape: f32[2,8,1], index: 0, kind: input, shape index: {}]
  %s1 = inlined_call_operand.hbm [shape: f32[2,8,128], index: 1, kind: output, shape index: {}]
  %s2 = sld [smem:[#allocation0]]
  $region37: #{tpu_custom_call.1} parent=0
    _
  %s4 = ssub.s32 1, %s2
  %s5 = scalar_select 0, %s4, %s2
  $region1: #{tpu_custom_call.1} parent=0
    #allocation2 [shape = 'u8[8192]{0}', space=vmem, size = 0x2000, scoped, tag = 'output window, operand 0']
    #allocation3 [shape = 's32[2]{0}', space=sflag, size = 0x8, scoped, tag = 'scoped memory for tpu_custom_call.1']
    %6 = vsyncpa [#allocation3], 0
    %s7 = scalar_lea.sflag [#allocation3], 1
    %8 = vsyncpa %s7, 0
    loop: start=0, step=1, limit=4
    $region2: #{tpu_custom_call.1} parent=1 // loop_pre_header
      _
    $region3: #{tpu_custom_call.1} parent=1 // loop_header
      %s10 = sphi 0, %s14
      %p11 = scmp.ge.s32.totalorder %s10, 4
      %s17 = sphi 0, %s29
      %s18 = sphi 0, %s25
      %s19 = sphi 0, %s17
      %s20 = sphi 0, %s18
      %s21 = sphi 0, %s19
      %s22 = sphi 0, %s20
      %s32 = sphi 0, %s34
      %s35 = sphi 0, %s32
      %s36 = sphi 0, %s35
      %s52 = sphi 0, %s36
      %s60 = sphi 0, %s62
      %s63 = sphi 0, %s60
      %s64 = sphi 0, %s63
      %s80 = sphi 0, %s64
    $region4: #{tpu_custom_call.1} parent=1 // loop_header_branch
      %13 = sbr.rel (%p11) target = $region8
    $region5: #{tpu_custom_call.1} parent=1 // loop_body
      %s15 = ssub.s32 %s10, 1
      %s16 = ssub.s32 %s10, 2
      %s23 = sadd.s32 1, %s18
      %p24 = scmp.ge.s32.totalorder %s23, 1
      %s25 = scalar_select %p24, 0, %s23
      %s26 = sadd.s32 1, %s17
      %s27 = scalar_select %p24, %s26, %s17
      %p28 = scmp.ge.s32.totalorder %s27, 2
      %s29 = scalar_select %p28, 0, %s27
      %s30 = ssub.s32 %s17, %s29
      %p31 = scmp.eq.s32.totalorder %s30, 0
      %s33 = sadd.s32 %s32, 1
      %s34 = scalar_select %p31, %s32, %s33
      %p37 = pneg %p31
      %p38 = scmp.eq.s32.totalorder %s10, 1
      %p39 = por %p37, %p38
      %p40 = scmp.ne.s32.totalorder %s32, %s35
      %p41 = scmp.eq.s32.totalorder %s10, 0
      %p42 = por %p40, %p41
      %p43 = scmp.ne.s32.totalorder %s32, %s35
      %p44 = scmp.eq.s32.totalorder %s15, 1
      %p45 = por %p43, %p44
      %p46 = scmp.ne.s32.totalorder %s35, %s36
      %p47 = scmp.eq.s32.totalorder %s15, 0
      %p48 = por %p46, %p47
      %p49 = scmp.ne.s32.totalorder %s35, %s36
      %p50 = scmp.eq.s32.totalorder %s16, 1
      %p51 = por %p49, %p50
      %p53 = scmp.ne.s32.totalorder %s36, %s52
      %p54 = scmp.eq.s32.totalorder %s16, 0
      %p55 = por %p53, %p54
      %s56 = ssub.s32 %s17, %s29
      %s57 = ssub.s32 %s18, %s25
      %s58 = sor.u32 %s56, %s57
      %p59 = scmp.eq.s32.totalorder %s58, 0
      %s61 = sadd.s32 %s60, 1
      %s62 = scalar_select %p59, %s60, %s61
      %p65 = pneg %p59
      %p66 = scmp.eq.s32.totalorder %s10, 1
      %p67 = por %p65, %p66
      %p68 = scmp.ne.s32.totalorder %s60, %s63
      %p69 = scmp.eq.s32.totalorder %s10, 0
      %p70 = por %p68, %p69
      %p71 = scmp.ne.s32.totalorder %s60, %s63
      %p72 = scmp.eq.s32.totalorder %s15, 1
      %p73 = por %p71, %p72
      %p74 = scmp.ne.s32.totalorder %s63, %s64
      %p75 = scmp.eq.s32.totalorder %s15, 0
      %p76 = por %p74, %p75
      %p77 = scmp.ne.s32.totalorder %s63, %s64
      %p78 = scmp.eq.s32.totalorder %s16, 1
      %p79 = por %p77, %p78
      %p81 = scmp.ne.s32.totalorder %s64, %s80
      %p82 = scmp.eq.s32.totalorder %s16, 0
      %p83 = por %p81, %p82
      %p84 = scmp.le.s32.totalorder 1, %s10
      %p85 = scmp.lt.s32.totalorder %s10, 3
      %p86 = pnand %p84, %p85
      %p87 = pneg %p86
      // Predicated region
      $region9: #{tpu_custom_call.1} parent=5 // pred_check
        _
      $region10: #{tpu_custom_call.1} parent=5 // pred_check_branch
        %89 = sbr.rel (%p86) target = $region12
      $region11: #{tpu_custom_call.1} parent=5 // pred_region
        %s90 = ssub.s32 %s10, 1
      $region12: #{tpu_custom_call.1} parent=5 // pred_fallthru
        _
      %p91 = scmp.lt.s32.totalorder %s10, 2
      // Predicated region
      $region13: #{tpu_custom_call.1} parent=5 // pred_check
        %p92 = pneg %p91
      $region14: #{tpu_custom_call.1} parent=5 // pred_check_branch
        %94 = sbr.rel (%p92) target = $region16
      $region15: #{tpu_custom_call.1} parent=5 // pred_region
        // Predicated region
        $region17: #{tpu_custom_call.1} parent=15 // pred_check
          %p95 = pneg %p42
        $region18: #{tpu_custom_call.1} parent=15 // pred_check_branch
          %97 = sbr.rel (%p95) target = $region20
        $region19: #{tpu_custom_call.1} parent=15 // pred_region
          %p98 = scmp.lt.s32.totalorder %s17, 1
          %s99 = scalar_select %p98, %s17, 1
          %s100 = smul.addr %s99, 8
          %s101 = scalar_lea.vmem %s0, %s100
        $region20: #{tpu_custom_call.1} parent=15 // pred_fallthru
          _
      $region16: #{tpu_custom_call.1} parent=5 // pred_fallthru
        _
      %p102 = scmp.le.s32.totalorder 1, %s10
      %p103 = scmp.lt.s32.totalorder %s10, 3
      %p104 = pnand %p102, %p103
      %p105 = pneg %p104
      // Predicated region
      $region21: #{tpu_custom_call.1} parent=5 // pred_check
        _
      $region22: #{tpu_custom_call.1} parent=5 // pred_check_branch
        %107 = sbr.rel (%p104) target = $region24
      $region23: #{tpu_custom_call.1} parent=5 // pred_region
        %s108 = ssub.s32 %s10, 1
        %p109 = scmp.lt.s32.totalorder %s19, 1
        %s110 = scalar_select %p109, %s19, 1
        %s111 = smul.addr %s110, 8
        %s112 = scalar_lea.vmem %s0, %s111
        %p113 = pneg %p48
        %p114 = pneg %p45
        %p115 = pneg %p76
        %p116 = pneg %p73
        %s117 = sand.u32 %s63, 1
        %s118 = scalar_lea.sflag [#allocation3], %s117
        %s119 = sand.u32 %s63, 1
        %s120 = smul.addr %s119, 8
        %s121 = scalar_lea.vmem [#allocation2], %s120
        %p122 = scmp.lt.s32.totalorder %s19, 1
        %s123 = scalar_select %p122, %s19, 1
        %s124 = smul.addr %s123, 8
        %s125 = scalar_lea.vmem %s0, %s124
        %v126 = vld [vmem:[%s125] sm:$0xff]
        %v127 = vmul.f32 %v126, 3.0
        %v128 = vmul.f32 %v127, %v126
        %130 = vset.pattern.permute.xlu0 0
        %131 = vperm.xlu0 %130, %v128
        %v132 = vpop.permute.xlu0 %131
        %134 = vst [vmem:[%s121] sm:$0xff] %v132
        %s135 = sand.u32 %s63, 1
        %s136 = scalar_lea.sflag [#allocation3], %s135
        %s137 = sand.u32 %s63, 1
        %s138 = smul.addr %s137, 8
        %s139 = scalar_lea.vmem [#allocation2], %s138
        // Predicated region
        $region25: #{tpu_custom_call.1} parent=23 // pred_check
          %p140 = pneg %p73
        $region26: #{tpu_custom_call.1} parent=23 // pred_check_branch
          %142 = sbr.rel (%p140) target = $region28
        $region27: #{tpu_custom_call.1} parent=23 // pred_region
          %144 = vsyncadd %s136, 0
          %s145 = sadd.s32 %s20, %s19
          %s146 = smul.addr %s145, 8
          %s147 = scalar_lea.hbm %s1, %s146
          %s149 = sshll.u32 %s139, 4
          %s150 = int_to_ptr.vmem [resolvable:$true] %s149
          %s151 = sshll.u32 %s147, 4
          %s152 = int_to_ptr.hbm [resolvable:$true] %s151
          %154 = dma.vmem_to_hbm [thread:$0]  %s150, 128, %s152, %s136
        $region28: #{tpu_custom_call.1} parent=23 // pred_fallthru
          _
      $region24: #{tpu_custom_call.1} parent=5 // pred_fallthru
        _
      %p155 = scmp.le.s32.totalorder 2, %s10
      // Predicated region
      $region29: #{tpu_custom_call.1} parent=5 // pred_check
        %p156 = pneg %p155
      $region30: #{tpu_custom_call.1} parent=5 // pred_check_branch
        %158 = sbr.rel (%p156) target = $region32
      $region31: #{tpu_custom_call.1} parent=5 // pred_region
        %s159 = ssub.s32 %s10, 2
        // Predicated region
        $region33: #{tpu_custom_call.1} parent=31 // pred_check
          %p160 = pneg %p79
        $region34: #{tpu_custom_call.1} parent=31 // pred_check_branch
          %162 = sbr.rel (%p160) target = $region36
        $region35: #{tpu_custom_call.1} parent=31 // pred_region
          %s163 = sand.u32 %s64, 1
          %s164 = scalar_lea.sflag [#allocation3], %s163
          %s165 = sand.u32 %s64, 1
          %s166 = smul.addr %s165, 8
          %s167 = scalar_lea.vmem [#allocation2], %s166
          %169 = dma.done %s164, 128
        $region36: #{tpu_custom_call.1} parent=31 // pred_fallthru
          _
      $region32: #{tpu_custom_call.1} parent=5 // pred_fallthru
        _
    $region6: #{tpu_custom_call.1} parent=1 // loop_footer
      %s14 = sadd.s32 1, %s10
    $region7: #{tpu_custom_call.1} parent=1 // loop_footer_branch
      %9 = sbr.rel target = $region3
    $region8: #{tpu_custom_call.1} parent=1 // loop_exit
      _
    %170 = vsyncpa [#allocation3], 1
    %s171 = scalar_lea.sflag [#allocation3], 1
    %172 = vsyncpa %s171, 1

</llo_original>
